<compile_context>
chip_gen: v6e
topology: v6e:2x2x1
jax: 0.10.0
libtpu: 0.0.40
codegen_flags: <defaults>
</compile_context>

<pallas_src>
import math

import jax
import jax.numpy as jnp
from jax.experimental import pallas as pl
from jax.experimental.pallas import tpu as pltpu


def _refined_reciprocal(d):
    # EUP approx reciprocal (separate bundle slot -> ~free) + two Newton-Raphson
    # refinements so accuracy matches a true f32 divide.
    inv = pl.reciprocal(d, approx=True)
    inv = inv * (2.0 - d * inv)
    inv = inv * (2.0 - d * inv)
    return inv


def _softmax_rows_kernel(x_ref, o_ref):
    x = x_ref[...].astype(jnp.float32)            # f32 compute even for bf16 input
    e = jnp.exp(x)
    denom = jnp.sum(e, axis=-1, keepdims=True)    # (rows, 1) XLU reduce
    o_ref[...] = (e * _refined_reciprocal(denom)).astype(o_ref.dtype)


def _softmax_folded_kernel(mask_ref, x_ref, o_ref):
    # Lane-dense variant for small D: several logical rows share one physical
    # 128*k-wide row; per-segment sums via a block-diagonal 0/1 mask matmul
    # (MXU is idle in this mem-bound kernel).
    x = x_ref[...].astype(jnp.float32)
    e = jnp.exp(x)
    denom = jnp.dot(e, mask_ref[...], preferred_element_type=jnp.float32)
    o_ref[...] = (e * _refined_reciprocal(denom)).astype(o_ref.dtype)


def _sublane_multiple(dtype):
    bits = jnp.dtype(dtype).itemsize * 8
    return max(8, 256 // bits)        # 8 rows f32, 16 bf16, 32 int8/fp8


def _round_up(a, b):
    return -(-a // b) * b


def _compiler_params():
    return pltpu.CompilerParams(
        dimension_semantics=("parallel",),     # long grid -> both TCs on v7x
        vmem_limit_bytes=32 * 1024 * 1024,
    )


def _row_tile(n_rows, row_bytes, sub, block_bytes):
    """Rows per block: biggest sublane-aligned tile <= block_bytes.

    If the cap covers all rows, the single block exactly equals the array's
    row extent (always a legal block shape).  Otherwise the tile is a multiple
    of `sub` and the ragged tail block is masked by Pallas.
    """
    br_cap = max(sub, (block_bytes // row_bytes) // sub * sub)
    if br_cap >= n_rows:
        return n_rows, 1
    return br_cap, pl.cdiv(n_rows, br_cap)


def _softmax2d(x, *, block_bytes=2 * 1024 * 1024, max_fold_width=512):
    n, d = x.shape
    sub = _sublane_multiple(x.dtype)
    itemsize = jnp.dtype(x.dtype).itemsize

    lane_width = math.lcm(d, 128)
    use_fold = d < 128 and lane_width <= max_fold_width

    if use_fold:
        fold = lane_width // d                   # logical rows per physical row
        n_pad = _round_up(n, fold)               # only so the fold-reshape is exact
        if n_pad != n:
            x = jnp.pad(x, ((0, n_pad - n), (0, 0)))   # exp(0)=1: harmless pad rows
        rows = n_pad // fold
        xf = x.reshape(rows, lane_width)
        seg = jnp.arange(lane_width, dtype=jnp.int32) // d
        mask = (seg[:, None] == seg[None, :]).astype(jnp.float32)
        br, grid = _row_tile(rows, lane_width * itemsize, sub, block_bytes)
        out = pl.pallas_call(
            _softmax_folded_kernel,
            out_shape=jax.ShapeDtypeStruct((rows, lane_width), x.dtype),
            grid_spec=pltpu.PrefetchScalarGridSpec(
                num_scalar_prefetch=0,
                grid=(grid,),
                in_specs=[
                    pl.BlockSpec((lane_width, lane_width), lambda i: (0, 0)),
                    pl.BlockSpec((br, lane_width), lambda i: (i, 0)),
                ],
                out_specs=pl.BlockSpec((br, lane_width), lambda i: (i, 0)),
            ),
            compiler_params=_compiler_params(),
        )(mask, xf)
        out = out.reshape(n_pad, d)
        return out[:n] if n_pad != n else out

    # Plain path: D already lane-dense (or too awkward to fold); the whole
    # reduction axis stays resident in each block, ragged N masked by Pallas.
    # TODO(synk): for extreme D (row > block_bytes) a two-pass D-tiled reduction
    # would be needed; single-pass covers any realistic feature width.
    br, grid = _row_tile(n, d * itemsize, sub, block_bytes)
    return pl.pallas_call(
        _softmax_rows_kernel,
        out_shape=jax.ShapeDtypeStruct((n, d), x.dtype),
        grid_spec=pltpu.PrefetchScalarGridSpec(
            num_scalar_prefetch=0,
            grid=(grid,),
            in_specs=[pl.BlockSpec((br, d), lambda i: (i, 0))],
            out_specs=pl.BlockSpec((br, d), lambda i: (i, 0)),
        ),
        compiler_params=_compiler_params(),
    )(x)


def softmax(x, dim=1, **kw):
    """Equivalent of SoftMax(dim).forward(x): exp(x)/sum(exp(x), dim, keepdim)."""
    x = jnp.asarray(x)
    xm = jnp.moveaxis(x, dim, -1)
    lead = xm.shape[:-1]
    d = xm.shape[-1]
    n = 1
    for s in lead:
        n *= s
    out2d = _softmax2d(xm.reshape(n, d), **kw)
    return jnp.moveaxis(out2d.reshape(*lead, d), -1, dim)


def softmax_ref(x, dim=1):
    e = jnp.exp(x)
    return e / jnp.sum(e, axis=dim, keepdims=True)


if __name__ == "__main__":
    key = jax.random.PRNGKey(0)
    k1, k2, k3, k4 = jax.random.split(key, 4)

    # (seq=8, hidden=32), dim=1: exercises the lane-dense folded path (D=32<128).
    x_small = jax.random.normal(k1, (8, 32), dtype=jnp.float32)
    # Lane-dense plain path (D % 128 == 0), single block.
    x_wide = jax.random.normal(k2, (64, 256), dtype=jnp.float32)

    for x in (x_small, x_wide):
        out = jax.block_until_ready(softmax(x, dim=1))
        ref = softmax_ref(x, dim=1)
        assert out.shape == ref.shape and out.dtype == ref.dtype
        assert jnp.allclose(out, ref, atol=1e-5, rtol=1e-5)
        assert jnp.allclose(jnp.sum(out, axis=1),
                            jnp.ones((x.shape[0],), jnp.float32), atol=1e-5)

    # Ragged-N plain path (forced tiny block so the grid has a masked tail),
    # also a non-128-multiple D (masked lane stores, full-dim block).
    x_rag = jax.random.normal(k3, (50, 200), dtype=jnp.float32)
    out = jax.block_until_ready(softmax(x_rag, dim=1, block_bytes=8192))
    assert jnp.allclose(out, softmax_ref(x_rag, dim=1), atol=1e-5, rtol=1e-5)

    # Ragged folded path (N not a multiple of fold AND a masked tail block).
    x_ragf = jax.random.normal(k4, (37, 32), dtype=jnp.float32)
    out = jax.block_until_ready(softmax(x_ragf, dim=1, block_bytes=4096))
    assert jnp.allclose(out, softmax_ref(x_ragf, dim=1), atol=1e-5, rtol=1e-5)

    # Docstring example from the torch module: tensor([1,2,3]), dim=0.
    out = jax.block_until_ready(softmax(jnp.array([1.0, 2.0, 3.0]), dim=0))
    assert jnp.allclose(out, jnp.array([0.0900, 0.2447, 0.6652]), atol=1e-3)

    print("KERNEL_OK")
</pallas_src>

<mosaic_0001>
module attributes {stable_mosaic.version = 11 : i64} {
  func.func @_softmax_folded_kernel(%arg0: i32, %arg1: memref<128x128xf32, #tpu.memory_space<vmem>>, %arg2: memref<2x128xf32, #tpu.memory_space<vmem>>, %arg3: memref<2x128xf32, #tpu.memory_space<vmem>>) attributes {dimension_semantics = [#tpu.dimension_semantics<parallel>], iteration_bounds = array<i64: 1>, scalar_prefetch = 0 : i64, scratch_operands = 0 : i64, tpu.core_type = #tpu.core_type<tc>, window_params = [{pipeline_mode = #tpu.pipeline_mode<synchronous>, transform_indices = @transform_0, window_bounds = array<i64: 128, 128>}, {transform_indices = @transform_1, window_bounds = array<i64: 2, 128>}, {transform_indices = @transform_2, window_bounds = array<i64: 2, 128>}]} {
    %c0 = arith.constant 0 : index
    %c0_0 = arith.constant 0 : index
    %0 = vector.load %arg2[%c0, %c0_0] : memref<2x128xf32, #tpu.memory_space<vmem>>, vector<2x128xf32>
    %1 = math.exp %0 : vector<2x128xf32>
    %c0_1 = arith.constant 0 : index
    %c0_2 = arith.constant 0 : index
    %2 = vector.load %arg1[%c0_1, %c0_2] : memref<128x128xf32, #tpu.memory_space<vmem>>, vector<128x128xf32>
    %cst = arith.constant dense<0.000000e+00> : vector<2x128xf32>
    %3 = tpu.matmul %1, %2, %cst {dimension_numbers = #tpu.dot_dimension_numbers<[1], [0], [0], [1], [0, 0, 1, 1], [], []>} : vector<2x128xf32>, vector<128x128xf32>, vector<2x128xf32> -> vector<2x128xf32>
    %4 = tpu.reciprocal %3 {approx = true} : vector<2x128xf32> -> vector<2x128xf32>
    %5 = arith.mulf %3, %4 : vector<2x128xf32>
    %cst_3 = arith.constant 2.000000e+00 : f32
    %6 = vector.broadcast %cst_3 : f32 to vector<2x128xf32>
    %7 = arith.subf %6, %5 : vector<2x128xf32>
    %8 = arith.mulf %4, %7 : vector<2x128xf32>
    %9 = arith.mulf %3, %8 : vector<2x128xf32>
    %cst_4 = arith.constant 2.000000e+00 : f32
    %10 = vector.broadcast %cst_4 : f32 to vector<2x128xf32>
    %11 = arith.subf %10, %9 : vector<2x128xf32>
    %12 = arith.mulf %8, %11 : vector<2x128xf32>
    %13 = arith.mulf %1, %12 : vector<2x128xf32>
    %c0_5 = arith.constant 0 : index
    %c0_6 = arith.constant 0 : index
    %14 = vector.load %arg3[%c0_5, %c0_6] : memref<2x128xf32, #tpu.memory_space<vmem>>, vector<2x128xf32>
    tpu.vector_store %arg3[%c0_5, %c0_6], %13 {strides = array<i32>} : memref<2x128xf32, #tpu.memory_space<vmem>>, vector<2x128xf32>,
    return
  }
  func.func @transform_0(%arg0: i32) -> (i32, i32) {
    %c0_i32 = arith.constant 0 : i32
    %c0_i32_0 = arith.constant 0 : i32
    %c0_i32_1 = arith.constant 0 : i32
    return %c0_i32, %c0_i32_0 : i32, i32
  }
  func.func @transform_1(%arg0: i32) -> (i32, i32) {
    %c0_i32 = arith.constant 0 : i32
    %c0_i32_0 = arith.constant 0 : i32
    return %arg0, %c0_i32 : i32, i32
  }
  func.func @transform_2(%arg0: i32) -> (i32, i32) {
    %c0_i32 = arith.constant 0 : i32
    %c0_i32_0 = arith.constant 0 : i32
    return %arg0, %c0_i32 : i32, i32
  }
}

</mosaic_0001>

<llo_original>
// kernel: tpu_custom_call.1
$region0: #{tpu_custom_call.1}
  #allocation0 [shape = 'u32[]', space=smem, size = 0x4, offset = 0x4, fixed_abs, tag = 'smem constant byte address 0x4 - core index']
  #allocation1 [shape = 'u32[144,128]{1,0:T(1,128)}', space=vmem, size = 0x12000, scoped, tag = 'internal scratch']
  %s0 = inlined_call_operand.hbm [shape: f32[128,128], index: 0, kind: input, shape index: {}]
  %s1 = inlined_call_operand.hbm [shape: f32[2,128], index: 1, kind: input, shape index: {}]
  %s2 = inlined_call_operand.hbm [shape: f32[2,128], index: 2, kind: output, shape index: {}]
  %s3 = sld [smem:[#allocation0]]
  $region26: #{tpu_custom_call.1} parent=0
    _
  %s5 = ssub.s32 1, %s3
  %s6 = scalar_select 0, %s5, %s3
  $region1: #{tpu_custom_call.1} parent=0
    #allocation2 [shape = 'u8[65536]{0}', space=vmem, size = 0x10000, scoped, tag = 'input window, operand 0, single buffered']
    #allocation3 [shape = 's32[1]{0}', space=sflag, size = 0x4, scoped, tag = 'scoped memory for tpu_custom_call.1']
    #allocation4 [shape = 's32[1]{0}', space=sflag, size = 0x4, scoped, tag = 'scoped memory for tpu_custom_call.1']
    #allocation5 [shape = 'u8[1024]{0}', space=vmem, size = 0x400, scoped, tag = 'input window, operand 1, single buffered']
    #allocation6 [shape = 's32[1]{0}', space=sflag, size = 0x4, scoped, tag = 'scoped memory for tpu_custom_call.1']
    #allocation7 [shape = 'u8[1024]{0}', space=vmem, size = 0x400, scoped, tag = 'output window, operand 0, single buffered']
    %7 = vsyncpa [#allocation3], 0
    %8 = vsyncpa [#allocation6], 0
    %9 = vsyncpa [#allocation4], 0
    // Predicated region
    $region2: #{tpu_custom_call.1} parent=1 // pred_check
      _
    $region3: #{tpu_custom_call.1} parent=1 // pred_check_branch
      %11 = sbr.rel (0) target = $region5
    $region4: #{tpu_custom_call.1} parent=1 // pred_region
      %s13 = ssub.s32 2048, 2048
      %14 = vsyncadd [#allocation3], %s13
      %s15 = sshll.u32 [#allocation2], 4
      %s16 = int_to_ptr.vmem [resolvable:$true] %s15
      %21 = dma.hbm_to_vmem [thread:$0]  %s0, 2048, %s16, [#allocation3], 128, 128, 8
    $region5: #{tpu_custom_call.1} parent=1 // pred_fallthru
      _
    // Predicated region
    $region6: #{tpu_custom_call.1} parent=1 // pred_check
      _
    $region7: #{tpu_custom_call.1} parent=1 // pred_check_branch
      %23 = sbr.rel (0) target = $region9
    $region8: #{tpu_custom_call.1} parent=1 // pred_region
      %s25 = ssub.s32 32, 32
      %26 = vsyncadd [#allocation6], %s25
      %s28 = sshll.u32 [#allocation5], 4
      %s29 = int_to_ptr.vmem [resolvable:$true] %s28
      %31 = dma.hbm_to_vmem [thread:$0]  %s1, 32, %s29, [#allocation6]
    $region9: #{tpu_custom_call.1} parent=1 // pred_fallthru
      _
    // Predicated region
    $region10: #{tpu_custom_call.1} parent=1 // pred_check
      _
    $region11: #{tpu_custom_call.1} parent=1 // pred_check_branch
      %33 = sbr.rel (0) target = $region13
    $region12: #{tpu_custom_call.1} parent=1 // pred_region
      %34 = dma.done [#allocation3], 2048
    $region13: #{tpu_custom_call.1} parent=1 // pred_fallthru
      _
    // Predicated region
    $region14: #{tpu_custom_call.1} parent=1 // pred_check
      _
    $region15: #{tpu_custom_call.1} parent=1 // pred_check_branch
      %36 = sbr.rel (0) target = $region17
    $region16: #{tpu_custom_call.1} parent=1 // pred_region
      %37 = dma.done [#allocation6], 32
    $region17: #{tpu_custom_call.1} parent=1 // pred_fallthru
      _
    %v38 = vld [vmem:[#allocation5] sm:$0x3]
    %v39 = vmul.f32 %v38, 1.442695
    %v40 = vpow.pop %v39
    %v41 = vld [vmem:[#allocation2] sm:$0xff]
    %v42 = vld [vmem:[#allocation2 + $0x8] sm:$0xff]
    %v43 = vld [vmem:[#allocation2 + $0x10] sm:$0xff]
    %v44 = vld [vmem:[#allocation2 + $0x18] sm:$0xff]
    %v45 = vld [vmem:[#allocation2 + $0x20] sm:$0xff]
    %v46 = vld [vmem:[#allocation2 + $0x28] sm:$0xff]
    %v47 = vld [vmem:[#allocation2 + $0x30] sm:$0xff]
    %v48 = vld [vmem:[#allocation2 + $0x38] sm:$0xff]
    %v49 = vld [vmem:[#allocation2 + $0x40] sm:$0xff]
    %v50 = vld [vmem:[#allocation2 + $0x48] sm:$0xff]
    %v51 = vld [vmem:[#allocation2 + $0x50] sm:$0xff]
    %v52 = vld [vmem:[#allocation2 + $0x58] sm:$0xff]
    %v53 = vld [vmem:[#allocation2 + $0x60] sm:$0xff]
    %v54 = vld [vmem:[#allocation2 + $0x68] sm:$0xff]
    %v55 = vld [vmem:[#allocation2 + $0x70] sm:$0xff]
    %v56 = vld [vmem:[#allocation2 + $0x78] sm:$0xff]
    %57 = vmatprep.subr.mxu0 0.0
    %58 = vmatpush1.msra.mxu0 %v56
    %59 = vmatprep.subr.mxu0 0.0
    %60 = vmatpush1.msra.mxu0 %v55
    %61 = vmatprep.subr.mxu0 0.0
    %62 = vmatpush1.msra.mxu0 %v54
    %63 = vmatprep.subr.mxu0 0.0
    %64 = vmatpush1.msra.mxu0 %v53
    %65 = vmatprep.subr.mxu0 0.0
    %66 = vmatpush1.msra.mxu0 %v52
    %67 = vmatprep.subr.mxu0 0.0
    %68 = vmatpush1.msra.mxu0 %v51
    %69 = vmatprep.subr.mxu0 0.0
    %70 = vmatpush1.msra.mxu0 %v50
    %71 = vmatprep.subr.mxu0 0.0
    %72 = vmatpush1.msra.mxu0 %v49
    %73 = vmatprep.subr.mxu0 0.0
    %74 = vmatpush1.msra.mxu0 %v48
    %75 = vmatprep.subr.mxu0 0.0
    %76 = vmatpush1.msra.mxu0 %v47
    %77 = vmatprep.subr.mxu0 0.0
    %78 = vmatpush1.msra.mxu0 %v46
    %79 = vmatprep.subr.mxu0 0.0
    %80 = vmatpush1.msra.mxu0 %v45
    %81 = vmatprep.subr.mxu0 0.0
    %82 = vmatpush1.msra.mxu0 %v44
    %83 = vmatprep.subr.mxu0 0.0
    %84 = vmatpush1.msra.mxu0 %v43
    %85 = vmatprep.subr.mxu0 0.0
    %86 = vmatpush1.msra.mxu0 %v42
    %87 = vmatprep.subr.mxu0 0.0
    %88 = vmatpush1.msra.mxu0 %v41
    %89 = vmatprep.subr.mxu0 0.0
    %90 = vmatpush2.msra.mxu0 0.0
    %91 = vmatprep.subr.mxu0 0.0
    %92 = vmatpush2.msra.mxu0 0.0
    %93 = vmatprep.subr.mxu0 0.0
    %94 = vmatpush2.msra.mxu0 0.0
    %95 = vmatprep.subr.mxu0 0.0
    %96 = vmatpush2.msra.mxu0 0.0
    %97 = vmatprep.subr.mxu0 0.0
    %98 = vmatpush2.msra.mxu0 0.0
    %99 = vmatprep.subr.mxu0 0.0
    %100 = vmatpush2.msra.mxu0 0.0
    %101 = vmatprep.subr.mxu0 0.0
    %102 = vmatpush2.msra.mxu0 0.0
    %103 = vmatprep.subr.mxu0 0.0
    %104 = vmatpush2.msra.mxu0 0.0
    %105 = vmatprep.subr.mxu0 0.0
    %106 = vmatpush2.msra.mxu0 0.0
    %107 = vmatprep.subr.mxu0 0.0
    %108 = vmatpush2.msra.mxu0 0.0
    %109 = vmatprep.subr.mxu0 0.0
    %110 = vmatpush2.msra.mxu0 0.0
    %111 = vmatprep.subr.mxu0 0.0
    %112 = vmatpush2.msra.mxu0 0.0
    %113 = vmatprep.subr.mxu0 0.0
    %114 = vmatpush2.msra.mxu0 0.0
    %115 = vmatprep.subr.mxu0 0.0
    %116 = vmatpush2.msra.mxu0 0.0
    %117 = vmatprep.subr.mxu0 0.0
    %118 = vmatpush2.msra.mxu0 0.0
    %119 = vmatprep.subr.mxu0 0.0
    %120 = vmatpush2.msra.mxu0 0.0
    %121 = vmatprep.mubr.f32.mxu0 0.0
    %122 = vmatmul.mubr.f32.gmra.mxu0 %v40
    %v123 = vpop.f32.mrf.mxu0
    %v124 = vadd.f32 0.0, %v123
    %v125 = vpop.f32.mrf.mxu0
    %126 = vdwg.mxu0
    %v127 = vrcp.pop %v124
    %v128 = vmul.f32 %v124, %v127
    %v129 = vsub.f32 2.0, %v128
    %v130 = vmul.f32 %v127, %v129
    %v131 = vmul.f32 %v124, %v130
    %v132 = vsub.f32 2.0, %v131
    %v133 = vmul.f32 %v130, %v132
    %v134 = vmul.f32 %v40, %v133
    %135 = vst [vmem:[#allocation7] sm:$0x3] %v134
    // Predicated region
    $region18: #{tpu_custom_call.1} parent=1 // pred_check
      _
    $region19: #{tpu_custom_call.1} parent=1 // pred_check_branch
      %137 = sbr.rel (0) target = $region21
    $region20: #{tpu_custom_call.1} parent=1 // pred_region
      %s139 = ssub.s32 32, 32
      %140 = vsyncadd [#allocation4], %s139
      %s142 = sshll.u32 [#allocation7], 4
      %s143 = int_to_ptr.vmem [resolvable:$true] %s142
      %145 = dma.vmem_to_hbm [thread:$0]  %s143, 32, %s2, [#allocation4]
    $region21: #{tpu_custom_call.1} parent=1 // pred_fallthru
      _
    // Predicated region
    $region22: #{tpu_custom_call.1} parent=1 // pred_check
      _
    $region23: #{tpu_custom_call.1} parent=1 // pred_check_branch
      %147 = sbr.rel (0) target = $region25
    $region24: #{tpu_custom_call.1} parent=1 // pred_region
      %148 = dma.done [#allocation4], 32
    $region25: #{tpu_custom_call.1} parent=1 // pred_fallthru
      _
    %149 = vsyncpa [#allocation3], 1
    %150 = vsyncpa [#allocation6], 1
    %151 = vsyncpa [#allocation4], 1

</llo_original>
